<compile_context>
chip_gen: v5e
topology: v5e:2x2
jax: 0.10.0
libtpu: 0.0.40
codegen_flags: <defaults>
</compile_context>

<pallas_src>
import jax
import jax.numpy as jnp
from jax.experimental import pallas as pl
from jax.experimental.pallas import tpu as pltpu

EPS = 1e-12
HIDDEN = 256


def add_layernorm_kernel(a_ref, b_ref, gamma_ref, beta_ref, o_ref):
    # a_ref, b_ref, o_ref: (tile_rows, H) VMEM tiles
    # gamma_ref, beta_ref: (1, H), VMEM-resident for the whole kernel
    x = a_ref[...].astype(jnp.float32) + b_ref[...].astype(jnp.float32)

    # Two-pass, numerically stable mean / biased variance over the last dim
    # (matches torch.nn.LayerNorm).  Data is already in VMEM so the second
    # pass is free filler under the DMA slot (kernel is HBM-bound).
    mean = jnp.mean(x, axis=-1, keepdims=True)
    xc = x - mean
    var = jnp.mean(xc * xc, axis=-1, keepdims=True)
    inv_std = jax.lax.rsqrt(var + EPS)

    gamma = gamma_ref[...].astype(jnp.float32)
    beta = beta_ref[...].astype(jnp.float32)
    o_ref[...] = (xc * inv_std * gamma + beta).astype(o_ref.dtype)


def _device_kind():
    try:
        return jax.devices()[0].device_kind.lower()
    except Exception:
        return ""


def _is_v7x():
    return "v7" in _device_kind()


def _choose_tile_rows(rows_padded):
    """rows_padded is a multiple of 8; returns a multiple of 8."""
    # Tiny problem: one grid step — per-step overhead (~0.35 us) would exceed
    # any pipelining gain.
    if rows_padded <= 256:
        return rows_padded
    # Bigger problems: at least 2 steps so DMA-in / compute / DMA-out overlap,
    # blocks of >=128 rows, capped so double-buffered blocks stay small vs VMEM
    # (64 MiB physical on v7x, 128 MiB on v5e/v6e).
    cap = 2048 if _is_v7x() else 1024
    tr = pl.cdiv(rows_padded, 2)
    tr = ((tr + 7) // 8) * 8
    tr = max(128, min(tr, cap))
    return tr


def add_layernorm(x315, x281, gamma, beta, *, tile_rows=None):
    assert x315.shape == x281.shape
    B, S, H = x315.shape
    assert H == HIDDEN

    rows = B * S
    a2 = x315.reshape(rows, H)
    b2 = x281.reshape(rows, H)
    gamma2 = gamma.reshape(1, H)
    beta2 = beta.reshape(1, H)

    # Pad rows to a multiple of 8 so the (8, 128) block constraint is always
    # satisfied with normal tiling (no full-array fallback).
    pad = (-rows) % 8
    if pad:
        a2 = jnp.pad(a2, ((0, pad), (0, 0)))
        b2 = jnp.pad(b2, ((0, pad), (0, 0)))
    rows_p = rows + pad

    if tile_rows is None:
        tile_rows = _choose_tile_rows(rows_p)

    n_steps = pl.cdiv(rows_p, tile_rows)

    # Real cross-TensorCore sharding only pays off on v7x for large row counts;
    # plain "parallel" does not change codegen, so use CORE_PARALLEL when it
    # matters and "arbitrary" otherwise.
    if _is_v7x() and rows_p >= 2048 and n_steps > 1:
        row_sem = pltpu.CORE_PARALLEL
    else:
        row_sem = "arbitrary"

    out = pl.pallas_call(
        add_layernorm_kernel,
        out_shape=jax.ShapeDtypeStruct((rows_p, H), x315.dtype),
        grid_spec=pltpu.PrefetchScalarGridSpec(
            num_scalar_prefetch=0,
            grid=(n_steps,),
            in_specs=[
                pl.BlockSpec((tile_rows, H), lambda i: (i, 0)),
                pl.BlockSpec((tile_rows, H), lambda i: (i, 0)),
                # Params stay resident in VMEM; no per-step DMA / double-buffer.
                pl.BlockSpec(memory_space=pltpu.MemorySpace.VMEM),
                pl.BlockSpec(memory_space=pltpu.MemorySpace.VMEM),
            ],
            out_specs=pl.BlockSpec((tile_rows, H), lambda i: (i, 0)),
        ),
        compiler_params=pltpu.CompilerParams(
            dimension_semantics=(row_sem,)
        ),
    )(a2, b2, gamma2, beta2)

    if pad:
        out = out[:rows]
    return out.reshape(B, S, H)


if __name__ == "__main__":
    key = jax.random.PRNGKey(0)
    k1, k2 = jax.random.split(key)

    # Shapes implied by the module's forward: (1, 384, 256)
    x315 = jax.random.normal(k1, (1, 384, 256), dtype=jnp.float32)
    x281 = jax.random.normal(k2, (1, 384, 256), dtype=jnp.float32)

    # Deterministic LayerNorm parameters (PyTorch default init: weight=1, bias=0)
    gamma = jnp.ones((256,), dtype=jnp.float32)
    beta = jnp.zeros((256,), dtype=jnp.float32)

    out = add_layernorm(x315, x281, gamma, beta)
    out = jax.block_until_ready(out)

    # Reference check in plain JAX
    x = x315 + x281
    mean = jnp.mean(x, axis=-1, keepdims=True)
    var = jnp.mean((x - mean) ** 2, axis=-1, keepdims=True)
    ref = (x - mean) / jnp.sqrt(var + EPS) * gamma + beta
    assert jnp.allclose(out, ref, atol=1e-5, rtol=1e-5), "mismatch vs reference"

    print("KERNEL_OK")
</pallas_src>

<mosaic_0001>
module attributes {stable_mosaic.version = 11 : i64} {
  func.func @add_layernorm_kernel(%arg0: i32, %arg1: memref<192x256xf32, #tpu.memory_space<vmem>>, %arg2: memref<192x256xf32, #tpu.memory_space<vmem>>, %arg3: memref<1x256xf32, #tpu.memory_space<vmem>>, %arg4: memref<1x256xf32, #tpu.memory_space<vmem>>, %arg5: memref<192x256xf32, #tpu.memory_space<vmem>>) attributes {dimension_semantics = [#tpu.dimension_semantics<arbitrary>], iteration_bounds = array<i64: 2>, scalar_prefetch = 0 : i64, scratch_operands = 0 : i64, tpu.core_type = #tpu.core_type<tc>, window_params = [{transform_indices = @transform_0, window_bounds = array<i64: 192, 256>}, {transform_indices = @transform_1, window_bounds = array<i64: 192, 256>}, {pipeline_mode = #tpu.pipeline_mode<synchronous>, transform_indices = @transform_2, window_bounds = array<i64: 1, 256>}, {pipeline_mode = #tpu.pipeline_mode<synchronous>, transform_indices = @transform_3, window_bounds = array<i64: 1, 256>}, {transform_indices = @transform_4, window_bounds = array<i64: 192, 256>}]} {
    %c0 = arith.constant 0 : index
    %c0_0 = arith.constant 0 : index
    %0 = vector.load %arg1[%c0, %c0_0] : memref<192x256xf32, #tpu.memory_space<vmem>>, vector<192x256xf32>
    %c0_1 = arith.constant 0 : index
    %c0_2 = arith.constant 0 : index
    %1 = vector.load %arg2[%c0_1, %c0_2] : memref<192x256xf32, #tpu.memory_space<vmem>>, vector<192x256xf32>
    %2 = arith.addf %0, %1 : vector<192x256xf32>
    %cst = arith.constant dense<0.000000e+00> : vector<192xf32>
    %3 = vector.multi_reduction <add>, %2, %cst [1] : vector<192x256xf32> to vector<192xf32>
    %4 = vector.shape_cast %3 : vector<192xf32> to vector<192x1xf32>
    %cst_3 = arith.constant 2.560000e+02 : f32
    %5 = vector.broadcast %cst_3 : f32 to vector<192x1xf32>
    %6 = arith.divf %4, %5 : vector<192x1xf32>
    %7 = vector.broadcast %6 : vector<192x1xf32> to vector<192x256xf32>
    %8 = arith.subf %2, %7 : vector<192x256xf32>
    %9 = arith.mulf %8, %8 : vector<192x256xf32>
    %cst_4 = arith.constant dense<0.000000e+00> : vector<192xf32>
    %10 = vector.multi_reduction <add>, %9, %cst_4 [1] : vector<192x256xf32> to vector<192xf32>
    %11 = vector.shape_cast %10 : vector<192xf32> to vector<192x1xf32>
    %cst_5 = arith.constant 2.560000e+02 : f32
    %12 = vector.broadcast %cst_5 : f32 to vector<192x1xf32>
    %13 = arith.divf %11, %12 : vector<192x1xf32>
    %cst_6 = arith.constant 9.99999996E-13 : f32
    %14 = vector.broadcast %cst_6 : f32 to vector<192x1xf32>
    %15 = arith.addf %13, %14 : vector<192x1xf32>
    %16 = math.rsqrt %15 : vector<192x1xf32>
    %c0_7 = arith.constant 0 : index
    %c0_8 = arith.constant 0 : index
    %17 = vector.load %arg3[%c0_7, %c0_8] : memref<1x256xf32, #tpu.memory_space<vmem>>, vector<1x256xf32>
    %c0_9 = arith.constant 0 : index
    %c0_10 = arith.constant 0 : index
    %18 = vector.load %arg4[%c0_9, %c0_10] : memref<1x256xf32, #tpu.memory_space<vmem>>, vector<1x256xf32>
    %19 = vector.broadcast %16 : vector<192x1xf32> to vector<192x256xf32>
    %20 = arith.mulf %8, %19 : vector<192x256xf32>
    %21 = vector.broadcast %17 : vector<1x256xf32> to vector<192x256xf32>
    %22 = arith.mulf %20, %21 : vector<192x256xf32>
    %23 = vector.broadcast %18 : vector<1x256xf32> to vector<192x256xf32>
    %24 = arith.addf %22, %23 : vector<192x256xf32>
    %c0_11 = arith.constant 0 : index
    %c0_12 = arith.constant 0 : index
    %25 = vector.load %arg5[%c0_11, %c0_12] : memref<192x256xf32, #tpu.memory_space<vmem>>, vector<192x256xf32>
    tpu.vector_store %arg5[%c0_11, %c0_12], %24 {strides = array<i32>} : memref<192x256xf32, #tpu.memory_space<vmem>>, vector<192x256xf32>,
    return
  }
  func.func @transform_0(%arg0: i32) -> (i32, i32) {
    %c0_i32 = arith.constant 0 : i32
    %c0_i32_0 = arith.constant 0 : i32
    return %arg0, %c0_i32 : i32, i32
  }
  func.func @transform_1(%arg0: i32) -> (i32, i32) {
    %c0_i32 = arith.constant 0 : i32
    %c0_i32_0 = arith.constant 0 : i32
    return %arg0, %c0_i32 : i32, i32
  }
  func.func @transform_2(%arg0: i32) -> (i32, i32) {
    %c0_i32 = arith.constant 0 : i32
    %c0_i32_0 = arith.constant 0 : i32
    %c0_i32_1 = arith.constant 0 : i32
    return %c0_i32, %c0_i32_0 : i32, i32
  }
  func.func @transform_3(%arg0: i32) -> (i32, i32) {
    %c0_i32 = arith.constant 0 : i32
    %c0_i32_0 = arith.constant 0 : i32
    %c0_i32_1 = arith.constant 0 : i32
    return %c0_i32, %c0_i32_0 : i32, i32
  }
  func.func @transform_4(%arg0: i32) -> (i32, i32) {
    %c0_i32 = arith.constant 0 : i32
    %c0_i32_0 = arith.constant 0 : i32
    return %arg0, %c0_i32 : i32, i32
  }
}

</mosaic_0001>

<llo_original>
// kernel: tpu_custom_call.1
$region0: #{tpu_custom_call.1}
  #allocation0 [shape = 'u32[]', space=smem, size = 0x4, offset = 0x4, fixed_abs, tag = 'smem constant byte address 0x4 - core index']
  #allocation1 [shape = 'u32[72,128]{1,0:T(1,128)}', space=vmem, size = 0x9000, scoped, tag = 'internal scratch']
  %s0 = inlined_call_operand.hbm [shape: f32[384,256], index: 0, kind: input, shape index: {}]
  %s1 = inlined_call_operand.hbm [shape: f32[384,256], index: 1, kind: input, shape index: {}]
  %s2 = inlined_call_operand.hbm [shape: f32[1,256], index: 2, kind: input, shape index: {}]
  %s3 = inlined_call_operand.vmem [shape: f32[1,256], index: 3, kind: input, shape index: {}]
  %s4 = inlined_call_operand.hbm [shape: f32[384,256], index: 4, kind: output, shape index: {}]
  %s5 = sld [smem:[#allocation0]]
  $region61: #{tpu_custom_call.1} parent=0
    _
  %s7 = ssub.s32 1, %s5
  %s8 = scalar_select 0, %s7, %s5
  $region1: #{tpu_custom_call.1} parent=0
    #allocation2 [shape = 'u8[393216]{0}', space=vmem, size = 0x60000, scoped, tag = 'input window, operand 0']
    #allocation3 [shape = 's32[2]{0}', space=sflag, size = 0x8, scoped, tag = 'scoped memory for tpu_custom_call.1']
    #allocation4 [shape = 's32[2]{0}', space=sflag, size = 0x8, scoped, tag = 'scoped memory for tpu_custom_call.1']
    #allocation5 [shape = 'u8[393216]{0}', space=vmem, size = 0x60000, scoped, tag = 'input window, operand 1']
    #allocation6 [shape = 's32[2]{0}', space=sflag, size = 0x8, scoped, tag = 'scoped memory for tpu_custom_call.1']
    #allocation7 [shape = 'u8[1024]{0}', space=vmem, size = 0x400, scoped, tag = 'input window, operand 2, single buffered']
    #allocation8 [shape = 'u8[393216]{0}', space=vmem, size = 0x60000, scoped, tag = 'output window, operand 0']
    %9 = vsyncpa [#allocation3], 0
    %s10 = scalar_lea.sflag [#allocation3], 1
    %11 = vsyncpa %s10, 0
    %12 = vsyncpa [#allocation6], 0
    %s13 = scalar_lea.sflag [#allocation6], 1
    %14 = vsyncpa %s13, 0
    %15 = vsyncpa [#allocation4], 0
    %s16 = scalar_lea.sflag [#allocation4], 1
    %17 = vsyncpa %s16, 0
    loop: start=0, step=1, limit=4
    $region2: #{tpu_custom_call.1} parent=1 // loop_pre_header
      _
    $region3: #{tpu_custom_call.1} parent=1 // loop_header
      %s19 = sphi 0, %s23
      %p20 = scmp.ge.s32.totalorder %s19, 4
      %s29 = sphi 0, %s31
      %s32 = sphi 0, %s29
      %s33 = sphi 0, %s32
      %s49 = sphi 0, %s33
      %s55 = sphi 0, %s57
      %s58 = sphi 0, %s55
      %s59 = sphi 0, %s58
      %s75 = sphi 0, %s59
      %s79 = sphi 0, %s79
      %s81 = sphi 0, %s79
      %s82 = sphi 0, %s81
      %s96 = sphi 0, %s82
      %s100 = sphi 0, %s100
      %s102 = sphi 0, %s100
      %s103 = sphi 0, %s102
      %s117 = sphi 0, %s103
      %s123 = sphi 0, %s125
      %s126 = sphi 0, %s123
      %s127 = sphi 0, %s126
      %s143 = sphi 0, %s127
    $region4: #{tpu_custom_call.1} parent=1 // loop_header_branch
      %22 = sbr.rel (%p20) target = $region8
    $region5: #{tpu_custom_call.1} parent=1 // loop_body
      %s24 = ssub.s32 %s19, 1
      %s25 = ssub.s32 %s19, 2
      %s26 = sadd.s32 %s19, 1
      %s27 = ssub.s32 %s19, %s26
      %p28 = scmp.eq.s32.totalorder %s27, 0
      %s30 = sadd.s32 %s29, 1
      %s31 = scalar_select %p28, %s29, %s30
      %p34 = pneg %p28
      %p35 = scmp.eq.s32.totalorder %s19, 1
      %p36 = por %p34, %p35
      %p37 = scmp.ne.s32.totalorder %s29, %s32
      %p38 = scmp.eq.s32.totalorder %s19, 0
      %p39 = por %p37, %p38
      %p40 = scmp.ne.s32.totalorder %s29, %s32
      %p41 = scmp.eq.s32.totalorder %s24, 1
      %p42 = por %p40, %p41
      %p43 = scmp.ne.s32.totalorder %s32, %s33
      %p44 = scmp.eq.s32.totalorder %s24, 0
      %p45 = por %p43, %p44
      %p46 = scmp.ne.s32.totalorder %s32, %s33
      %p47 = scmp.eq.s32.totalorder %s25, 1
      %p48 = por %p46, %p47
      %p50 = scmp.ne.s32.totalorder %s33, %s49
      %p51 = scmp.eq.s32.totalorder %s25, 0
      %p52 = por %p50, %p51
      %s53 = ssub.s32 %s19, %s26
      %p54 = scmp.eq.s32.totalorder %s53, 0
      %s56 = sadd.s32 %s55, 1
      %s57 = scalar_select %p54, %s55, %s56
      %p60 = pneg %p54
      %p61 = scmp.eq.s32.totalorder %s19, 1
      %p62 = por %p60, %p61
      %p63 = scmp.ne.s32.totalorder %s55, %s58
      %p64 = scmp.eq.s32.totalorder %s19, 0
      %p65 = por %p63, %p64
      %p66 = scmp.ne.s32.totalorder %s55, %s58
      %p67 = scmp.eq.s32.totalorder %s24, 1
      %p68 = por %p66, %p67
      %p69 = scmp.ne.s32.totalorder %s58, %s59
      %p70 = scmp.eq.s32.totalorder %s24, 0
      %p71 = por %p69, %p70
      %p72 = scmp.ne.s32.totalorder %s58, %s59
      %p73 = scmp.eq.s32.totalorder %s25, 1
      %p74 = por %p72, %p73
      %p76 = scmp.ne.s32.totalorder %s59, %s75
      %p77 = scmp.eq.s32.totalorder %s25, 0
      %p78 = por %p76, %p77
      %s80 = sadd.s32 %s79, 1
      %p83 = scmp.eq.s32.totalorder %s19, 1
      %p84 = scmp.ne.s32.totalorder %s79, %s81
      %p85 = scmp.eq.s32.totalorder %s19, 0
      %p86 = por %p84, %p85
      %p87 = scmp.ne.s32.totalorder %s79, %s81
      %p88 = scmp.eq.s32.totalorder %s24, 1
      %p89 = por %p87, %p88
      %p90 = scmp.ne.s32.totalorder %s81, %s82
      %p91 = scmp.eq.s32.totalorder %s24, 0
      %p92 = por %p90, %p91
      %p93 = scmp.ne.s32.totalorder %s81, %s82
      %p94 = scmp.eq.s32.totalorder %s25, 1
      %p95 = por %p93, %p94
      %p97 = scmp.ne.s32.totalorder %s82, %s96
      %p98 = scmp.eq.s32.totalorder %s25, 0
      %p99 = por %p97, %p98
      %s101 = sadd.s32 %s100, 1
      %p104 = scmp.eq.s32.totalorder %s19, 1
      %p105 = scmp.ne.s32.totalorder %s100, %s102
      %p106 = scmp.eq.s32.totalorder %s19, 0
      %p107 = por %p105, %p106
      %p108 = scmp.ne.s32.totalorder %s100, %s102
      %p109 = scmp.eq.s32.totalorder %s24, 1
      %p110 = por %p108, %p109
      %p111 = scmp.ne.s32.totalorder %s102, %s103
      %p112 = scmp.eq.s32.totalorder %s24, 0
      %p113 = por %p111, %p112
      %p114 = scmp.ne.s32.totalorder %s102, %s103
      %p115 = scmp.eq.s32.totalorder %s25, 1
      %p116 = por %p114, %p115
      %p118 = scmp.ne.s32.totalorder %s103, %s117
      %p119 = scmp.eq.s32.totalorder %s25, 0
      %p120 = por %p118, %p119
      %s121 = ssub.s32 %s19, %s26
      %p122 = scmp.eq.s32.totalorder %s121, 0
      %s124 = sadd.s32 %s123, 1
      %s125 = scalar_select %p122, %s123, %s124
      %p128 = pneg %p122
      %p129 = scmp.eq.s32.totalorder %s19, 1
      %p130 = por %p128, %p129
      %p131 = scmp.ne.s32.totalorder %s123, %s126
      %p132 = scmp.eq.s32.totalorder %s19, 0
      %p133 = por %p131, %p132
      %p134 = scmp.ne.s32.totalorder %s123, %s126
      %p135 = scmp.eq.s32.totalorder %s24, 1
      %p136 = por %p134, %p135
      %p137 = scmp.ne.s32.totalorder %s126, %s127
      %p138 = scmp.eq.s32.totalorder %s24, 0
      %p139 = por %p137, %p138
      %p140 = scmp.ne.s32.totalorder %s126, %s127
      %p141 = scmp.eq.s32.totalorder %s25, 1
      %p142 = por %p140, %p141
      %p144 = scmp.ne.s32.totalorder %s127, %s143
      %p145 = scmp.eq.s32.totalorder %s25, 0
      %p146 = por %p144, %p145
      %p147 = scmp.le.s32.totalorder 1, %s19
      %p148 = scmp.lt.s32.totalorder %s19, 3
      %p149 = pnand %p147, %p148
      %p150 = pneg %p149
      // Predicated region
      $region9: #{tpu_custom_call.1} parent=5 // pred_check
        _
      $region10: #{tpu_custom_call.1} parent=5 // pred_check_branch
        %152 = sbr.rel (%p149) target = $region12
      $region11: #{tpu_custom_call.1} parent=5 // pred_region
        %s153 = ssub.s32 %s19, 1
        // Predicated region
        $region13: #{tpu_custom_call.1} parent=11 // pred_check
          %p154 = pneg %p92
        $region14: #{tpu_custom_call.1} parent=11 // pred_check_branch
          %156 = sbr.rel (%p154) target = $region16
        $region15: #{tpu_custom_call.1} parent=11 // pred_region
          %158 = vsyncadd [#allocation6], 0
          %s160 = sshll.u32 %s2, 4
          %s161 = int_to_ptr.hbm [resolvable:$true] %s160
          %s162 = sshll.u32 [#allocation7], 4
          %s163 = int_to_ptr.vmem [resolvable:$true] %s162
          %165 = dma.hbm_to_vmem [thread:$0]  %s161, 32, %s163, [#allocation6]
        $region16: #{tpu_custom_call.1} parent=11 // pred_fallthru
          _
        // Predicated region
        $region17: #{tpu_custom_call.1} parent=11 // pred_check
          %p166 = pneg %p113
        $region18: #{tpu_custom_call.1} parent=11 // pred_check_branch
          %168 = sbr.rel (%p166) target = $region20
        $region19: #{tpu_custom_call.1} parent=11 // pred_region
          _
        $region20: #{tpu_custom_call.1} parent=11 // pred_fallthru
          _
      $region12: #{tpu_custom_call.1} parent=5 // pred_fallthru
        _
      %p169 = scmp.lt.s32.totalorder %s19, 2
      // Predicated region
      $region21: #{tpu_custom_call.1} parent=5 // pred_check
        %p170 = pneg %p169
      $region22: #{tpu_custom_call.1} parent=5 // pred_check_branch
        %172 = sbr.rel (%p170) target = $region24
      $region23: #{tpu_custom_call.1} parent=5 // pred_region
        // Predicated region
        $region25: #{tpu_custom_call.1} parent=23 // pred_check
          %p173 = pneg %p39
        $region26: #{tpu_custom_call.1} parent=23 // pred_check_branch
          %175 = sbr.rel (%p173) target = $region28
        $region27: #{tpu_custom_call.1} parent=23 // pred_region
          %s176 = sand.u32 %s29, 1
          %s177 = scalar_lea.sflag [#allocation3], %s176
          %s178 = sand.u32 %s29, 1
          %s179 = smul.addr %s178, 384
          %s180 = scalar_lea.vmem [#allocation2], %s179
          %s181 = smul.u32 24, %s19
          %183 = vsyncadd %s177, 0
          %s184 = smul.addr %s181, 2
          %s185 = smul.addr %s184, 8
          %s186 = scalar_lea.hbm %s0, %s185
          %s187 = sshll.u32 %s186, 4
          %s188 = int_to_ptr.hbm [resolvable:$true] %s187
          %s189 = sshll.u32 %s180, 4
          %s190 = int_to_ptr.vmem [resolvable:$true] %s189
          %195 = dma.hbm_to_vmem [thread:$0]  %s188, 6144, %s190, %s177, 256, 256, 16
        $region28: #{tpu_custom_call.1} parent=23 // pred_fallthru
          _
        // Predicated region
        $region29: #{tpu_custom_call.1} parent=23 // pred_check
          %p196 = pneg %p65
        $region30: #{tpu_custom_call.1} parent=23 // pred_check_branch
          %198 = sbr.rel (%p196) target = $region32
        $region31: #{tpu_custom_call.1} parent=23 // pred_region
          %s199 = sand.u32 %s19, 1
          %s200 = scalar_lea.sflag [#allocation6], %s199
          %s201 = sand.u32 %s55, 1
          %s202 = smul.addr %s201, 384
          %s203 = scalar_lea.vmem [#allocation5], %s202
          %s204 = smul.u32 24, %s19
          %206 = vsyncadd %s200, 0
          %s207 = smul.addr %s204, 2
          %s208 = smul.addr %s207, 8
          %s209 = scalar_lea.hbm %s1, %s208
          %s210 = sshll.u32 %s209, 4
          %s211 = int_to_ptr.hbm [resolvable:$true] %s210
          %s212 = sshll.u32 %s203, 4
          %s213 = int_to_ptr.vmem [resolvable:$true] %s212
          %218 = dma.hbm_to_vmem [thread:$0]  %s211, 6144, %s213, %s200, 256, 256, 16
        $region32: #{tpu_custom_call.1} parent=23 // pred_fallthru
          _
      $region24: #{tpu_custom_call.1} parent=5 // pred_fallthru
        _
      %p219 = scmp.le.s32.totalorder 1, %s19
      %p220 = scmp.lt.s32.totalorder %s19, 3
      %p221 = pnand %p219, %p220
      %p222 = pneg %p221
      // Predicated region
      $region33: #{tpu_custom_call.1} parent=5 // pred_check
        _
      $region34: #{tpu_custom_call.1} parent=5 // pred_check_branch
        %224 = sbr.rel (%p221) target = $region36
      $region35: #{tpu_custom_call.1} parent=5 // pred_region
        %s225 = ssub.s32 %s19, 1
        %s226 = sand.u32 %s32, 1
        %s227 = scalar_lea.sflag [#allocation3], %s226
        %s228 = sand.u32 %s32, 1
        %s229 = smul.addr %s228, 384
        %s230 = scalar_lea.vmem [#allocation2], %s229
        // Predicated region
        $region37: #{tpu_custom_call.1} parent=35 // pred_check
          %p231 = pneg %p45
        $region38: #{tpu_custom_call.1} parent=35 // pred_check_branch
          %233 = sbr.rel (%p231) target = $region40
        $region39: #{tpu_custom_call.1} parent=35 // pred_region
          %235 = dma.done %s227, 6144
        $region40: #{tpu_custom_call.1} parent=35 // pred_fallthru
          _
        %s236 = sand.u32 %s24, 1
        %s237 = scalar_lea.sflag [#allocation6], %s236
        %s238 = sand.u32 %s58, 1
        %s239 = smul.addr %s238, 384
        %s240 = scalar_lea.vmem [#allocation5], %s239
        // Predicated region
        $region41: #{tpu_custom_call.1} parent=35 // pred_check
          %p241 = pneg %p71
        $region42: #{tpu_custom_call.1} parent=35 // pred_check_branch
          %243 = sbr.rel (%p241) target = $region44
        $region43: #{tpu_custom_call.1} parent=35 // pred_region
          %245 = dma.done %s237, 6144
        $region44: #{tpu_custom_call.1} parent=35 // pred_fallthru
          _
        // Predicated region
        $region45: #{tpu_custom_call.1} parent=35 // pred_check
          %p246 = pneg %p92
        $region46: #{tpu_custom_call.1} parent=35 // pred_check_branch
          %248 = sbr.rel (%p246) target = $region48
        $region47: #{tpu_custom_call.1} parent=35 // pred_region
          %250 = dma.done [#allocation6], 32
        $region48: #{tpu_custom_call.1} parent=35 // pred_fallthru
          _
        %s251 = sand.u32 %s32, 1
        %s252 = scalar_lea.sflag [#allocation3], %s251
        %s253 = sand.u32 %s32, 1
        %s254 = smul.addr %s253, 384
        %s255 = scalar_lea.vmem [#allocation2], %s254
        %p256 = pneg %p45
        %p257 = pneg %p42
        %s258 = sand.u32 %s24, 1
        %s259 = scalar_lea.sflag [#allocation6], %s258
        %s260 = sand.u32 %s58, 1
        %s261 = smul.addr %s260, 384
        %s262 = scalar_lea.vmem [#allocation5], %s261
        %p263 = pneg %p71
        %p264 = pneg %p68
        %p265 = pneg %p92
        %p266 = pneg %p89
        %p267 = pneg %p113
        %p268 = pneg %p110
        %p269 = pneg %p139
        %p270 = pneg %p136
        %s271 = sand.u32 %s126, 1
        %s272 = scalar_lea.sflag [#allocation4], %s271
        %s273 = sand.u32 %s126, 1
        %s274 = smul.addr %s273, 384
        %s275 = scalar_lea.vmem [#allocation8], %s274
        %s276 = smul.u32 24, %s24
        %s277 = smul.u32 24, %s24
        %s278 = smul.u32 24, %s24
        %v279 = vld [vmem:[%s230] sm:$0xff]
        %v280 = vld [vmem:[%s230 + $0x8] sm:$0xff]
        %v281 = vld [vmem:[%s230 + $0x10] sm:$0xff]
        %v282 = vld [vmem:[%s230 + $0x18] sm:$0xff]
        %v283 = vld [vmem:[%s230 + $0x20] sm:$0xff]
        %v284 = vld [vmem:[%s230 + $0x28] sm:$0xff]
        %v285 = vld [vmem:[%s230 + $0x30] sm:$0xff]
        %v286 = vld [vmem:[%s230 + $0x38] sm:$0xff]
        %v287 = vld [vmem:[%s230 + $0x40] sm:$0xff]
        %v288 = vld [vmem:[%s230 + $0x48] sm:$0xff]
        %v289 = vld [vmem:[%s230 + $0x50] sm:$0xff]
        %v290 = vld [vmem:[%s230 + $0x58] sm:$0xff]
        %v291 = vld [vmem:[%s230 + $0x60] sm:$0xff]
        %v292 = vld [vmem:[%s230 + $0x68] sm:$0xff]
        %v293 = vld [vmem:[%s230 + $0x70] sm:$0xff]
        %v294 = vld [vmem:[%s230 + $0x78] sm:$0xff]
        %v295 = vld [vmem:[%s230 + $0x80] sm:$0xff]
        %v296 = vld [vmem:[%s230 + $0x88] sm:$0xff]
        %v297 = vld [vmem:[%s230 + $0x90] sm:$0xff]
        %v298 = vld [vmem:[%s230 + $0x98] sm:$0xff]
        %v299 = vld [vmem:[%s230 + $0xa0] sm:$0xff]
        %v300 = vld [vmem:[%s230 + $0xa8] sm:$0xff]
        %v301 = vld [vmem:[%s230 + $0xb0] sm:$0xff]
        %v302 = vld [vmem:[%s230 + $0xb8] sm:$0xff]
        %v303 = vld [vmem:[%s230 + $0xc0] sm:$0xff]
        %v304 = vld [vmem:[%s230 + $0xc8] sm:$0xff]
        %v305 = vld [vmem:[%s230 + $0xd0] sm:$0xff]
        %v306 = vld [vmem:[%s230 + $0xd8] sm:$0xff]
        %v307 = vld [vmem:[%s230 + $0xe0] sm:$0xff]
        %v308 = vld [vmem:[%s230 + $0xe8] sm:$0xff]
        %v309 = vld [vmem:[%s230 + $0xf0] sm:$0xff]
        %v310 = vld [vmem:[%s230 + $0xf8] sm:$0xff]
        %v311 = vld [vmem:[%s230 + $0x100] sm:$0xff]
        %v312 = vld [vmem:[%s230 + $0x108] sm:$0xff]
        %v313 = vld [vmem:[%s230 + $0x110] sm:$0xff]
        %v314 = vld [vmem:[%s230 + $0x118] sm:$0xff]
        %v315 = vld [vmem:[%s230 + $0x120] sm:$0xff]
        %v316 = vld [vmem:[%s230 + $0x128] sm:$0xff]
        %v317 = vld [vmem:[%s230 + $0x130] sm:$0xff]
        %v318 = vld [vmem:[%s230 + $0x138] sm:$0xff]
        %v319 = vld [vmem:[%s230 + $0x140] sm:$0xff]
        %v320 = vld [vmem:[%s230 + $0x148] sm:$0xff]
        %v321 = vld [vmem:[%s230 + $0x150] sm:$0xff]
        %v322 = vld [vmem:[%s230 + $0x158] sm:$0xff]
        %v323 = vld [vmem:[%s230 + $0x160] sm:$0xff]
        %v324 = vld [vmem:[%s230 + $0x168] sm:$0xff]
        %v325 = vld [vmem:[%s230 + $0x170] sm:$0xff]
        %v326 = vld [vmem:[%s230 + $0x178] sm:$0xff]
        %v327 = vld [vmem:[%s240] sm:$0xff]
        %v328 = vld [vmem:[%s240 + $0x8] sm:$0xff]
        %v329 = vld [vmem:[%s240 + $0x10] sm:$0xff]
        %v330 = vld [vmem:[%s240 + $0x18] sm:$0xff]
        %v331 = vld [vmem:[%s240 + $0x20] sm:$0xff]
        %v332 = vld [vmem:[%s240 + $0x28] sm:$0xff]
        %v333 = vld [vmem:[%s240 + $0x30] sm:$0xff]
        %v334 = vld [vmem:[%s240 + $0x38] sm:$0xff]
        %v335 = vld [vmem:[%s240 + $0x40] sm:$0xff]
        %v336 = vld [vmem:[%s240 + $0x48] sm:$0xff]
        %v337 = vld [vmem:[%s240 + $0x50] sm:$0xff]
        %v338 = vld [vmem:[%s240 + $0x58] sm:$0xff]
        %v339 = vld [vmem:[%s240 + $0x60] sm:$0xff]
        %v340 = vld [vmem:[%s240 + $0x68] sm:$0xff]
        %v341 = vld [vmem:[%s240 + $0x70] sm:$0xff]
        %v342 = vld [vmem:[%s240 + $0x78] sm:$0xff]
        %v343 = vld [vmem:[%s240 + $0x80] sm:$0xff]
        %v344 = vld [vmem:[%s240 + $0x88] sm:$0xff]
        %v345 = vld [vmem:[%s240 + $0x90] sm:$0xff]
        %v346 = vld [vmem:[%s240 + $0x98] sm:$0xff]
        %v347 = vld [vmem:[%s240 + $0xa0] sm:$0xff]
        %v348 = vld [vmem:[%s240 + $0xa8] sm:$0xff]
        %v349 = vld [vmem:[%s240 + $0xb0] sm:$0xff]
        %v350 = vld [vmem:[%s240 + $0xb8] sm:$0xff]
        %v351 = vld [vmem:[%s240 + $0xc0] sm:$0xff]
        %v352 = vld [vmem:[%s240 + $0xc8] sm:$0xff]
        %v353 = vld [vmem:[%s240 + $0xd0] sm:$0xff]
        %v354 = vld [vmem:[%s240 + $0xd8] sm:$0xff]
        %v355 = vld [vmem:[%s240 + $0xe0] sm:$0xff]
        %v356 = vld [vmem:[%s240 + $0xe8] sm:$0xff]
        %v357 = vld [vmem:[%s240 + $0xf0] sm:$0xff]
        %v358 = vld [vmem:[%s240 + $0xf8] sm:$0xff]
        %v359 = vld [vmem:[%s240 + $0x100] sm:$0xff]
        %v360 = vld [vmem:[%s240 + $0x108] sm:$0xff]
        %v361 = vld [vmem:[%s240 + $0x110] sm:$0xff]
        %v362 = vld [vmem:[%s240 + $0x118] sm:$0xff]
        %v363 = vld [vmem:[%s240 + $0x120] sm:$0xff]
        %v364 = vld [vmem:[%s240 + $0x128] sm:$0xff]
        %v365 = vld [vmem:[%s240 + $0x130] sm:$0xff]
        %v366 = vld [vmem:[%s240 + $0x138] sm:$0xff]
        %v367 = vld [vmem:[%s240 + $0x140] sm:$0xff]
        %v368 = vld [vmem:[%s240 + $0x148] sm:$0xff]
        %v369 = vld [vmem:[%s240 + $0x150] sm:$0xff]
        %v370 = vld [vmem:[%s240 + $0x158] sm:$0xff]
        %v371 = vld [vmem:[%s240 + $0x160] sm:$0xff]
        %v372 = vld [vmem:[%s240 + $0x168] sm:$0xff]
        %v373 = vld [vmem:[%s240 + $0x170] sm:$0xff]
        %v374 = vld [vmem:[%s240 + $0x178] sm:$0xff]
        %v375 = vadd.f32 %v279, %v327
        %v376 = vadd.f32 %v280, %v328
        %v377 = vadd.f32 %v281, %v329
        %v378 = vadd.f32 %v282, %v330
        %v379 = vadd.f32 %v283, %v331
        %v380 = vadd.f32 %v284, %v332
        %v381 = vadd.f32 %v285, %v333
        %v382 = vadd.f32 %v286, %v334
        %v383 = vadd.f32 %v287, %v335
        %v384 = vadd.f32 %v288, %v336
        %v385 = vadd.f32 %v289, %v337
        %v386 = vadd.f32 %v290, %v338
        %v387 = vadd.f32 %v291, %v339
        %v388 = vadd.f32 %v292, %v340
        %v389 = vadd.f32 %v293, %v341
        %v390 = vadd.f32 %v294, %v342
        %v391 = vadd.f32 %v295, %v343
        %v392 = vadd.f32 %v296, %v344
        %v393 = vadd.f32 %v297, %v345
        %v394 = vadd.f32 %v298, %v346
        %v395 = vadd.f32 %v299, %v347
        %v396 = vadd.f32 %v300, %v348
        %v397 = vadd.f32 %v301, %v349
        %v398 = vadd.f32 %v302, %v350
        %v399 = vadd.f32 %v303, %v351
        %v400 = vadd.f32 %v304, %v352
        %v401 = vadd.f32 %v305, %v353
        %v402 = vadd.f32 %v306, %v354
        %v403 = vadd.f32 %v307, %v355
        %v404 = vadd.f32 %v308, %v356
        %v405 = vadd.f32 %v309, %v357
        %v406 = vadd.f32 %v310, %v358
        %v407 = vadd.f32 %v311, %v359
        %v408 = vadd.f32 %v312, %v360
        %v409 = vadd.f32 %v313, %v361
        %v410 = vadd.f32 %v314, %v362
        %v411 = vadd.f32 %v315, %v363
        %v412 = vadd.f32 %v316, %v364
        %v413 = vadd.f32 %v317, %v365
        %v414 = vadd.f32 %v318, %v366
        %v415 = vadd.f32 %v319, %v367
        %v416 = vadd.f32 %v320, %v368
        %v417 = vadd.f32 %v321, %v369
        %v418 = vadd.f32 %v322, %v370
        %v419 = vadd.f32 %v323, %v371
        %v420 = vadd.f32 %v324, %v372
        %v421 = vadd.f32 %v325, %v373
        %v422 = vadd.f32 %v326, %v374
        %v423 = vadd.f32 %v375, %v376
        %424 = vadd.xlane.f32.xlu0 %v423
        %v425 = vpop.xlane.xlu0 %424
        %v426 = vadd.f32 %v377, %v378
        %427 = vadd.xlane.f32.xlu0 %v426
        %v428 = vpop.xlane.xlu0 %427
        %v429 = vadd.f32 %v379, %v380
        %430 = vadd.xlane.f32.xlu0 %v429
        %v431 = vpop.xlane.xlu0 %430
        %v432 = vadd.f32 %v381, %v382
        %433 = vadd.xlane.f32.xlu0 %v432
        %v434 = vpop.xlane.xlu0 %433
        %v435 = vadd.f32 %v383, %v384
        %436 = vadd.xlane.f32.xlu0 %v435
        %v437 = vpop.xlane.xlu0 %436
        %v438 = vadd.f32 %v385, %v386
        %439 = vadd.xlane.f32.xlu0 %v438
        %v440 = vpop.xlane.xlu0 %439
        %v441 = vadd.f32 %v387, %v388
        %442 = vadd.xlane.f32.xlu0 %v441
        %v443 = vpop.xlane.xlu0 %442
        %v444 = vadd.f32 %v389, %v390
        %445 = vadd.xlane.f32.xlu0 %v444
        %v446 = vpop.xlane.xlu0 %445
        %v447 = vadd.f32 %v391, %v392
        %448 = vadd.xlane.f32.xlu0 %v447
        %v449 = vpop.xlane.xlu0 %448
        %v450 = vadd.f32 %v393, %v394
        %451 = vadd.xlane.f32.xlu0 %v450
        %v452 = vpop.xlane.xlu0 %451
        %v453 = vadd.f32 %v395, %v396
        %454 = vadd.xlane.f32.xlu0 %v453
        %v455 = vpop.xlane.xlu0 %454
        %v456 = vadd.f32 %v397, %v398
        %457 = vadd.xlane.f32.xlu0 %v456
        %v458 = vpop.xlane.xlu0 %457
        %v459 = vadd.f32 %v399, %v400
        %460 = vadd.xlane.f32.xlu0 %v459
        %v461 = vpop.xlane.xlu0 %460
        %v462 = vadd.f32 %v401, %v402
        %463 = vadd.xlane.f32.xlu0 %v462
        %v464 = vpop.xlane.xlu0 %463
        %v465 = vadd.f32 %v403, %v404
        %466 = vadd.xlane.f32.xlu0 %v465
        %v467 = vpop.xlane.xlu0 %466
        %v468 = vadd.f32 %v405, %v406
        %469 = vadd.xlane.f32.xlu0 %v468
        %v470 = vpop.xlane.xlu0 %469
        %v471 = vadd.f32 %v407, %v408
        %472 = vadd.xlane.f32.xlu0 %v471
        %v473 = vpop.xlane.xlu0 %472
        %v474 = vadd.f32 %v409, %v410
        %475 = vadd.xlane.f32.xlu0 %v474
        %v476 = vpop.xlane.xlu0 %475
        %v477 = vadd.f32 %v411, %v412
        %478 = vadd.xlane.f32.xlu0 %v477
        %v479 = vpop.xlane.xlu0 %478
        %v480 = vadd.f32 %v413, %v414
        %481 = vadd.xlane.f32.xlu0 %v480
        %v482 = vpop.xlane.xlu0 %481
        %v483 = vadd.f32 %v415, %v416
        %484 = vadd.xlane.f32.xlu0 %v483
        %v485 = vpop.xlane.xlu0 %484
        %v486 = vadd.f32 %v417, %v418
        %487 = vadd.xlane.f32.xlu0 %v486
        %v488 = vpop.xlane.xlu0 %487
        %v489 = vadd.f32 %v419, %v420
        %490 = vadd.xlane.f32.xlu0 %v489
        %v491 = vpop.xlane.xlu0 %490
        %v492 = vadd.f32 %v421, %v422
        %493 = vadd.xlane.f32.xlu0 %v492
        %v494 = vpop.xlane.xlu0 %493
        %v495 = vrcp.pop 256.0
        %v496 = vmul.f32 256.0, %v495
        %v497 = vsub.f32 1.0, %v496
        %v498 = vmul.f32 %v495, %v497
        %v499 = vadd.f32 %v495, %v498
        %vm500 = vweird.f32 %v495
        %v501 = vsel %vm500, %v495, %v499
        %v502 = vmul.f32 %v425, %v501
        %v503 = vmul.f32 %v428, %v501
        %v504 = vmul.f32 %v431, %v501
        %v505 = vmul.f32 %v434, %v501
        %v506 = vmul.f32 %v437, %v501
        %v507 = vmul.f32 %v440, %v501
        %v508 = vmul.f32 %v443, %v501
        %v509 = vmul.f32 %v446, %v501
        %v510 = vmul.f32 %v449, %v501
        %v511 = vmul.f32 %v452, %v501
        %v512 = vmul.f32 %v455, %v501
        %v513 = vmul.f32 %v458, %v501
        %v514 = vmul.f32 %v461, %v501
        %v515 = vmul.f32 %v464, %v501
        %v516 = vmul.f32 %v467, %v501
        %v517 = vmul.f32 %v470, %v501
        %v518 = vmul.f32 %v473, %v501
        %v519 = vmul.f32 %v476, %v501
        %v520 = vmul.f32 %v479, %v501
        %v521 = vmul.f32 %v482, %v501
        %v522 = vmul.f32 %v485, %v501
        %v523 = vmul.f32 %v488, %v501
        %v524 = vmul.f32 %v491, %v501
        %v525 = vmul.f32 %v494, %v501
        %v526 = vsub.f32 %v375, %v502
        %v527 = vsub.f32 %v376, %v502
        %v528 = vsub.f32 %v377, %v503
        %v529 = vsub.f32 %v378, %v503
        %v530 = vsub.f32 %v379, %v504
        %v531 = vsub.f32 %v380, %v504
        %v532 = vsub.f32 %v381, %v505
        %v533 = vsub.f32 %v382, %v505
        %v534 = vsub.f32 %v383, %v506
        %v535 = vsub.f32 %v384, %v506
        %v536 = vsub.f32 %v385, %v507
        %v537 = vsub.f32 %v386, %v507
        %v538 = vsub.f32 %v387, %v508
        %v539 = vsub.f32 %v388, %v508
        %v540 = vsub.f32 %v389, %v509
        %v541 = vsub.f32 %v390, %v509
        %v542 = vsub.f32 %v391, %v510
        %v543 = vsub.f32 %v392, %v510
        %v544 = vsub.f32 %v393, %v511
        %v545 = vsub.f32 %v394, %v511
        %v546 = vsub.f32 %v395, %v512
        %v547 = vsub.f32 %v396, %v512
        %v548 = vsub.f32 %v397, %v513
        %v549 = vsub.f32 %v398, %v513
        %v550 = vsub.f32 %v399, %v514
        %v551 = vsub.f32 %v400, %v514
        %v552 = vsub.f32 %v401, %v515
        %v553 = vsub.f32 %v402, %v515
        %v554 = vsub.f32 %v403, %v516
        %v555 = vsub.f32 %v404, %v516
        %v556 = vsub.f32 %v405, %v517
        %v557 = vsub.f32 %v406, %v517
        %v558 = vsub.f32 %v407, %v518
        %v559 = vsub.f32 %v408, %v518
        %v560 = vsub.f32 %v409, %v519
        %v561 = vsub.f32 %v410, %v519
        %v562 = vsub.f32 %v411, %v520
        %v563 = vsub.f32 %v412, %v520
        %v564 = vsub.f32 %v413, %v521
        %v565 = vsub.f32 %v414, %v521
        %v566 = vsub.f32 %v415, %v522
        %v567 = vsub.f32 %v416, %v522
        %v568 = vsub.f32 %v417, %v523
        %v569 = vsub.f32 %v418, %v523
        %v570 = vsub.f32 %v419, %v524
        %v571 = vsub.f32 %v420, %v524
        %v572 = vsub.f32 %v421, %v525
        %v573 = vsub.f32 %v422, %v525
        %v574 = vmul.f32 %v526, %v526
        %v575 = vmul.f32 %v527, %v527
        %v576 = vmul.f32 %v528, %v528
        %v577 = vmul.f32 %v529, %v529
        %v578 = vmul.f32 %v530, %v530
        %v579 = vmul.f32 %v531, %v531
        %v580 = vmul.f32 %v532, %v532
        %v581 = vmul.f32 %v533, %v533
        %v582 = vmul.f32 %v534, %v534
        %v583 = vmul.f32 %v535, %v535
        %v584 = vmul.f32 %v536, %v536
        %v585 = vmul.f32 %v537, %v537
        %v586 = vmul.f32 %v538, %v538
        %v587 = vmul.f32 %v539, %v539
        %v588 = vmul.f32 %v540, %v540
        %v589 = vmul.f32 %v541, %v541
        %v590 = vmul.f32 %v542, %v542
        %v591 = vmul.f32 %v543, %v543
        %v592 = vmul.f32 %v544, %v544
        %v593 = vmul.f32 %v545, %v545
        %v594 = vmul.f32 %v546, %v546
        %v595 = vmul.f32 %v547, %v547
        %v596 = vmul.f32 %v548, %v548
        %v597 = vmul.f32 %v549, %v549
        %v598 = vmul.f32 %v550, %v550
        %v599 = vmul.f32 %v551, %v551
        %v600 = vmul.f32 %v552, %v552
        %v601 = vmul.f32 %v553, %v553
        %v602 = vmul.f32 %v554, %v554
        %v603 = vmul.f32 %v555, %v555
        %v604 = vmul.f32 %v556, %v556
        %v605 = vmul.f32 %v557, %v557
        %v606 = vmul.f32 %v558, %v558
        %v607 = vmul.f32 %v559, %v559
        %v608 = vmul.f32 %v560, %v560
        %v609 = vmul.f32 %v561, %v561
        %v610 = vmul.f32 %v562, %v562
        %v611 = vmul.f32 %v563, %v563
        %v612 = vmul.f32 %v564, %v564
        %v613 = vmul.f32 %v565, %v565
        %v614 = vmul.f32 %v566, %v566
        %v615 = vmul.f32 %v567, %v567
        %v616 = vmul.f32 %v568, %v568
        %v617 = vmul.f32 %v569, %v569
        %v618 = vmul.f32 %v570, %v570
        %v619 = vmul.f32 %v571, %v571
        %v620 = vmul.f32 %v572, %v572
        %v621 = vmul.f32 %v573, %v573
        %v622 = vadd.f32 %v574, %v575
        %623 = vadd.xlane.f32.xlu0 %v622
        %v624 = vpop.xlane.xlu0 %623
        %v625 = vadd.f32 %v576, %v577
        %626 = vadd.xlane.f32.xlu0 %v625
        %v627 = vpop.xlane.xlu0 %626
        %v628 = vadd.f32 %v578, %v579
        %629 = vadd.xlane.f32.xlu0 %v628
        %v630 = vpop.xlane.xlu0 %629
        %v631 = vadd.f32 %v580, %v581
        %632 = vadd.xlane.f32.xlu0 %v631
        %v633 = vpop.xlane.xlu0 %632
        %v634 = vadd.f32 %v582, %v583
        %635 = vadd.xlane.f32.xlu0 %v634
        %v636 = vpop.xlane.xlu0 %635
        %v637 = vadd.f32 %v584, %v585
        %638 = vadd.xlane.f32.xlu0 %v637
        %v639 = vpop.xlane.xlu0 %638
        %v640 = vadd.f32 %v586, %v587
        %641 = vadd.xlane.f32.xlu0 %v640
        %v642 = vpop.xlane.xlu0 %641
        %v643 = vadd.f32 %v588, %v589
        %644 = vadd.xlane.f32.xlu0 %v643
        %v645 = vpop.xlane.xlu0 %644
        %v646 = vadd.f32 %v590, %v591
        %647 = vadd.xlane.f32.xlu0 %v646
        %v648 = vpop.xlane.xlu0 %647
        %v649 = vadd.f32 %v592, %v593
        %650 = vadd.xlane.f32.xlu0 %v649
        %v651 = vpop.xlane.xlu0 %650
        %v652 = vadd.f32 %v594, %v595
        %653 = vadd.xlane.f32.xlu0 %v652
        %v654 = vpop.xlane.xlu0 %653
        %v655 = vadd.f32 %v596, %v597
        %656 = vadd.xlane.f32.xlu0 %v655
        %v657 = vpop.xlane.xlu0 %656
        %v658 = vadd.f32 %v598, %v599
        %659 = vadd.xlane.f32.xlu0 %v658
        %v660 = vpop.xlane.xlu0 %659
        %v661 = vadd.f32 %v600, %v601
        %662 = vadd.xlane.f32.xlu0 %v661
        %v663 = vpop.xlane.xlu0 %662
        %v664 = vadd.f32 %v602, %v603
        %665 = vadd.xlane.f32.xlu0 %v664
        %v666 = vpop.xlane.xlu0 %665
        %v667 = vadd.f32 %v604, %v605
        %668 = vadd.xlane.f32.xlu0 %v667
        %v669 = vpop.xlane.xlu0 %668
        %v670 = vadd.f32 %v606, %v607
        %671 = vadd.xlane.f32.xlu0 %v670
        %v672 = vpop.xlane.xlu0 %671
        %v673 = vadd.f32 %v608, %v609
        %674 = vadd.xlane.f32.xlu0 %v673
        %v675 = vpop.xlane.xlu0 %674
        %v676 = vadd.f32 %v610, %v611
        %677 = vadd.xlane.f32.xlu0 %v676
        %v678 = vpop.xlane.xlu0 %677
        %v679 = vadd.f32 %v612, %v613
        %680 = vadd.xlane.f32.xlu0 %v679
        %v681 = vpop.xlane.xlu0 %680
        %v682 = vadd.f32 %v614, %v615
        %683 = vadd.xlane.f32.xlu0 %v682
        %v684 = vpop.xlane.xlu0 %683
        %v685 = vadd.f32 %v616, %v617
        %686 = vadd.xlane.f32.xlu0 %v685
        %v687 = vpop.xlane.xlu0 %686
        %v688 = vadd.f32 %v618, %v619
        %689 = vadd.xlane.f32.xlu0 %v688
        %v690 = vpop.xlane.xlu0 %689
        %v691 = vadd.f32 %v620, %v621
        %692 = vadd.xlane.f32.xlu0 %v691
        %v693 = vpop.xlane.xlu0 %692
        %v694 = vmul.f32 %v624, %v501
        %v695 = vmul.f32 %v627, %v501
        %v696 = vmul.f32 %v630, %v501
        %v697 = vmul.f32 %v633, %v501
        %v698 = vmul.f32 %v636, %v501
        %v699 = vmul.f32 %v639, %v501
        %v700 = vmul.f32 %v642, %v501
        %v701 = vmul.f32 %v645, %v501
        %v702 = vmul.f32 %v648, %v501
        %v703 = vmul.f32 %v651, %v501
        %v704 = vmul.f32 %v654, %v501
        %v705 = vmul.f32 %v657, %v501
        %v706 = vmul.f32 %v660, %v501
        %v707 = vmul.f32 %v663, %v501
        %v708 = vmul.f32 %v666, %v501
        %v709 = vmul.f32 %v669, %v501
        %v710 = vmul.f32 %v672, %v501
        %v711 = vmul.f32 %v675, %v501
        %v712 = vmul.f32 %v678, %v501
        %v713 = vmul.f32 %v681, %v501
        %v714 = vmul.f32 %v684, %v501
        %v715 = vmul.f32 %v687, %v501
        %v716 = vmul.f32 %v690, %v501
        %v717 = vmul.f32 %v693, %v501
        %v718 = vadd.f32 %v694, 1e-12
        %v719 = vadd.f32 %v695, 1e-12
        %v720 = vadd.f32 %v696, 1e-12
        %v721 = vadd.f32 %v697, 1e-12
        %v722 = vadd.f32 %v698, 1e-12
        %v723 = vadd.f32 %v699, 1e-12
        %v724 = vadd.f32 %v700, 1e-12
        %v725 = vadd.f32 %v701, 1e-12
        %v726 = vadd.f32 %v702, 1e-12
        %v727 = vadd.f32 %v703, 1e-12
        %v728 = vadd.f32 %v704, 1e-12
        %v729 = vadd.f32 %v705, 1e-12
        %v730 = vadd.f32 %v706, 1e-12
        %v731 = vadd.f32 %v707, 1e-12
        %v732 = vadd.f32 %v708, 1e-12
        %v733 = vadd.f32 %v709, 1e-12
        %v734 = vadd.f32 %v710, 1e-12
        %v735 = vadd.f32 %v711, 1e-12
        %v736 = vadd.f32 %v712, 1e-12
        %v737 = vadd.f32 %v713, 1e-12
        %v738 = vadd.f32 %v714, 1e-12
        %v739 = vadd.f32 %v715, 1e-12
        %v740 = vadd.f32 %v716, 1e-12
        %v741 = vadd.f32 %v717, 1e-12
        %v742 = vrsqrt.pop %v718
        %v743 = vmul.f32 %v742, %v718
        %v744 = vmul.f32 %v743, %v742
        %v745 = vmul.f32 0.5, %v744
        %v746 = vsub.f32 1.5, %v745
        %v747 = vmul.f32 %v742, %v746
        %vm748 = vweird.f32 %v718
        %vm749 = vweird.f32 %v742
        %vm750 = vmor %vm748, %vm749
        %v751 = vsel %vm750, %v742, %v747
        %v752 = vrsqrt.pop %v719
        %v753 = vmul.f32 %v752, %v719
        %v754 = vmul.f32 %v753, %v752
        %v755 = vmul.f32 0.5, %v754
        %v756 = vsub.f32 1.5, %v755
        %v757 = vmul.f32 %v752, %v756
        %vm758 = vweird.f32 %v719
        %vm759 = vweird.f32 %v752
        %vm760 = vmor %vm758, %vm759
        %v761 = vsel %vm760, %v752, %v757
        %v762 = vrsqrt.pop %v720
        %v763 = vmul.f32 %v762, %v720
        %v764 = vmul.f32 %v763, %v762
        %v765 = vmul.f32 0.5, %v764
        %v766 = vsub.f32 1.5, %v765
        %v767 = vmul.f32 %v762, %v766
        %vm768 = vweird.f32 %v720
        %vm769 = vweird.f32 %v762
        %vm770 = vmor %vm768, %vm769
        %v771 = vsel %vm770, %v762, %v767
        %v772 = vrsqrt.pop %v721
        %v773 = vmul.f32 %v772, %v721
        %v774 = vmul.f32 %v773, %v772
        %v775 = vmul.f32 0.5, %v774
        %v776 = vsub.f32 1.5, %v775
        %v777 = vmul.f32 %v772, %v776
        %vm778 = vweird.f32 %v721
        %vm779 = vweird.f32 %v772
        %vm780 = vmor %vm778, %vm779
        %v781 = vsel %vm780, %v772, %v777
        %v782 = vrsqrt.pop %v722
        %v783 = vmul.f32 %v782, %v722
        %v784 = vmul.f32 %v783, %v782
        %v785 = vmul.f32 0.5, %v784
        %v786 = vsub.f32 1.5, %v785
        %v787 = vmul.f32 %v782, %v786
        %vm788 = vweird.f32 %v722
        %vm789 = vweird.f32 %v782
        %vm790 = vmor %vm788, %vm789
        %v791 = vsel %vm790, %v782, %v787
        %v792 = vrsqrt.pop %v723
        %v793 = vmul.f32 %v792, %v723
        %v794 = vmul.f32 %v793, %v792
        %v795 = vmul.f32 0.5, %v794
        %v796 = vsub.f32 1.5, %v795
        %v797 = vmul.f32 %v792, %v796
        %vm798 = vweird.f32 %v723
        %vm799 = vweird.f32 %v792
        %vm800 = vmor %vm798, %vm799
        %v801 = vsel %vm800, %v792, %v797
        %v802 = vrsqrt.pop %v724
        %v803 = vmul.f32 %v802, %v724
        %v804 = vmul.f32 %v803, %v802
        %v805 = vmul.f32 0.5, %v804
        %v806 = vsub.f32 1.5, %v805
        %v807 = vmul.f32 %v802, %v806
        %vm808 = vweird.f32 %v724
        %vm809 = vweird.f32 %v802
        %vm810 = vmor %vm808, %vm809
        %v811 = vsel %vm810, %v802, %v807
        %v812 = vrsqrt.pop %v725
        %v813 = vmul.f32 %v812, %v725
        %v814 = vmul.f32 %v813, %v812
        %v815 = vmul.f32 0.5, %v814
        %v816 = vsub.f32 1.5, %v815
        %v817 = vmul.f32 %v812, %v816
        %vm818 = vweird.f32 %v725
        %vm819 = vweird.f32 %v812
        %vm820 = vmor %vm818, %vm819
        %v821 = vsel %vm820, %v812, %v817
        %v822 = vrsqrt.pop %v726
        %v823 = vmul.f32 %v822, %v726
        %v824 = vmul.f32 %v823, %v822
        %v825 = vmul.f32 0.5, %v824
        %v826 = vsub.f32 1.5, %v825
        %v827 = vmul.f32 %v822, %v826
        %vm828 = vweird.f32 %v726
        %vm829 = vweird.f32 %v822
        %vm830 = vmor %vm828, %vm829
        %v831 = vsel %vm830, %v822, %v827
        %v832 = vrsqrt.pop %v727
        %v833 = vmul.f32 %v832, %v727
        %v834 = vmul.f32 %v833, %v832
        %v835 = vmul.f32 0.5, %v834
        %v836 = vsub.f32 1.5, %v835
        %v837 = vmul.f32 %v832, %v836
        %vm838 = vweird.f32 %v727
        %vm839 = vweird.f32 %v832
        %vm840 = vmor %vm838, %vm839
        %v841 = vsel %vm840, %v832, %v837
        %v842 = vrsqrt.pop %v728
        %v843 = vmul.f32 %v842, %v728
        %v844 = vmul.f32 %v843, %v842
        %v845 = vmul.f32 0.5, %v844
        %v846 = vsub.f32 1.5, %v845
        %v847 = vmul.f32 %v842, %v846
        %vm848 = vweird.f32 %v728
        %vm849 = vweird.f32 %v842
        %vm850 = vmor %vm848, %vm849
        %v851 = vsel %vm850, %v842, %v847
        %v852 = vrsqrt.pop %v729
        %v853 = vmul.f32 %v852, %v729
        %v854 = vmul.f32 %v853, %v852
        %v855 = vmul.f32 0.5, %v854
        %v856 = vsub.f32 1.5, %v855
        %v857 = vmul.f32 %v852, %v856
        %vm858 = vweird.f32 %v729
        %vm859 = vweird.f32 %v852
        %vm860 = vmor %vm858, %vm859
        %v861 = vsel %vm860, %v852, %v857
        %v862 = vrsqrt.pop %v730
        %v863 = vmul.f32 %v862, %v730
        %v864 = vmul.f32 %v863, %v862
        %v865 = vmul.f32 0.5, %v864
        %v866 = vsub.f32 1.5, %v865
        %v867 = vmul.f32 %v862, %v866
        %vm868 = vweird.f32 %v730
        %vm869 = vweird.f32 %v862
        %vm870 = vmor %vm868, %vm869
        %v871 = vsel %vm870, %v862, %v867
        %v872 = vrsqrt.pop %v731
        %v873 = vmul.f32 %v872, %v731
        %v874 = vmul.f32 %v873, %v872
        %v875 = vmul.f32 0.5, %v874
        %v876 = vsub.f32 1.5, %v875
        %v877 = vmul.f32 %v872, %v876
        %vm878 = vweird.f32 %v731
        %vm879 = vweird.f32 %v872
        %vm880 = vmor %vm878, %vm879
        %v881 = vsel %vm880, %v872, %v877
        %v882 = vrsqrt.pop %v732
        %v883 = vmul.f32 %v882, %v732
        %v884 = vmul.f32 %v883, %v882
        %v885 = vmul.f32 0.5, %v884
        %v886 = vsub.f32 1.5, %v885
        %v887 = vmul.f32 %v882, %v886
        %vm888 = vweird.f32 %v732
        %vm889 = vweird.f32 %v882
        %vm890 = vmor %vm888, %vm889
        %v891 = vsel %vm890, %v882, %v887
        %v892 = vrsqrt.pop %v733
        %v893 = vmul.f32 %v892, %v733
        %v894 = vmul.f32 %v893, %v892
        %v895 = vmul.f32 0.5, %v894
        %v896 = vsub.f32 1.5, %v895
        %v897 = vmul.f32 %v892, %v896
        %vm898 = vweird.f32 %v733
        %vm899 = vweird.f32 %v892
        %vm900 = vmor %vm898, %vm899
        %v901 = vsel %vm900, %v892, %v897
        %v902 = vrsqrt.pop %v734
        %v903 = vmul.f32 %v902, %v734
        %v904 = vmul.f32 %v903, %v902
        %v905 = vmul.f32 0.5, %v904
        %v906 = vsub.f32 1.5, %v905
        %v907 = vmul.f32 %v902, %v906
        %vm908 = vweird.f32 %v734
        %vm909 = vweird.f32 %v902
        %vm910 = vmor %vm908, %vm909
        %v911 = vsel %vm910, %v902, %v907
        %v912 = vrsqrt.pop %v735
        %v913 = vmul.f32 %v912, %v735
        %v914 = vmul.f32 %v913, %v912
        %v915 = vmul.f32 0.5, %v914
        %v916 = vsub.f32 1.5, %v915
        %v917 = vmul.f32 %v912, %v916
        %vm918 = vweird.f32 %v735
        %vm919 = vweird.f32 %v912
        %vm920 = vmor %vm918, %vm919
        %v921 = vsel %vm920, %v912, %v917
        %v922 = vrsqrt.pop %v736
        %v923 = vmul.f32 %v922, %v736
        %v924 = vmul.f32 %v923, %v922
        %v925 = vmul.f32 0.5, %v924
        %v926 = vsub.f32 1.5, %v925
        %v927 = vmul.f32 %v922, %v926
        %vm928 = vweird.f32 %v736
        %vm929 = vweird.f32 %v922
        %vm930 = vmor %vm928, %vm929
        %v931 = vsel %vm930, %v922, %v927
        %v932 = vrsqrt.pop %v737
        %v933 = vmul.f32 %v932, %v737
        %v934 = vmul.f32 %v933, %v932
        %v935 = vmul.f32 0.5, %v934
        %v936 = vsub.f32 1.5, %v935
        %v937 = vmul.f32 %v932, %v936
        %vm938 = vweird.f32 %v737
        %vm939 = vweird.f32 %v932
        %vm940 = vmor %vm938, %vm939
        %v941 = vsel %vm940, %v932, %v937
        %v942 = vrsqrt.pop %v738
        %v943 = vmul.f32 %v942, %v738
        %v944 = vmul.f32 %v943, %v942
        %v945 = vmul.f32 0.5, %v944
        %v946 = vsub.f32 1.5, %v945
        %v947 = vmul.f32 %v942, %v946
        %vm948 = vweird.f32 %v738
        %vm949 = vweird.f32 %v942
        %vm950 = vmor %vm948, %vm949
        %v951 = vsel %vm950, %v942, %v947
        %v952 = vrsqrt.pop %v739
        %v953 = vmul.f32 %v952, %v739
        %v954 = vmul.f32 %v953, %v952
        %v955 = vmul.f32 0.5, %v954
        %v956 = vsub.f32 1.5, %v955
        %v957 = vmul.f32 %v952, %v956
        %vm958 = vweird.f32 %v739
        %vm959 = vweird.f32 %v952
        %vm960 = vmor %vm958, %vm959
        %v961 = vsel %vm960, %v952, %v957
        %v962 = vrsqrt.pop %v740
        %v963 = vmul.f32 %v962, %v740
        %v964 = vmul.f32 %v963, %v962
        %v965 = vmul.f32 0.5, %v964
        %v966 = vsub.f32 1.5, %v965
        %v967 = vmul.f32 %v962, %v966
        %vm968 = vweird.f32 %v740
        %vm969 = vweird.f32 %v962
        %vm970 = vmor %vm968, %vm969
        %v971 = vsel %vm970, %v962, %v967
        %v972 = vrsqrt.pop %v741
        %v973 = vmul.f32 %v972, %v741
        %v974 = vmul.f32 %v973, %v972
        %v975 = vmul.f32 0.5, %v974
        %v976 = vsub.f32 1.5, %v975
        %v977 = vmul.f32 %v972, %v976
        %vm978 = vweird.f32 %v741
        %vm979 = vweird.f32 %v972
        %vm980 = vmor %vm978, %vm979
        %v981 = vsel %vm980, %v972, %v977
        %v982 = vld [vmem:[#allocation7] sm:$0x3]
        %v983 = vld [vmem:[%s3] sm:$0x3]
        %v984 = vmul.f32 %v526, %v751
        %v985 = vmul.f32 %v527, %v751
        %v986 = vmul.f32 %v528, %v761
        %v987 = vmul.f32 %v529, %v761
        %v988 = vmul.f32 %v530, %v771
        %v989 = vmul.f32 %v531, %v771
        %v990 = vmul.f32 %v532, %v781
        %v991 = vmul.f32 %v533, %v781
        %v992 = vmul.f32 %v534, %v791
        %v993 = vmul.f32 %v535, %v791
        %v994 = vmul.f32 %v536, %v801
        %v995 = vmul.f32 %v537, %v801
        %v996 = vmul.f32 %v538, %v811
        %v997 = vmul.f32 %v539, %v811
        %v998 = vmul.f32 %v540, %v821
        %v999 = vmul.f32 %v541, %v821
        %v1000 = vmul.f32 %v542, %v831
        %v1001 = vmul.f32 %v543, %v831
        %v1002 = vmul.f32 %v544, %v841
        %v1003 = vmul.f32 %v545, %v841
        %v1004 = vmul.f32 %v546, %v851
        %v1005 = vmul.f32 %v547, %v851
        %v1006 = vmul.f32 %v548, %v861
        %v1007 = vmul.f32 %v549, %v861
        %v1008 = vmul.f32 %v550, %v871
        %v1009 = vmul.f32 %v551, %v871
        %v1010 = vmul.f32 %v552, %v881
        %v1011 = vmul.f32 %v553, %v881
        %v1012 = vmul.f32 %v554, %v891
        %v1013 = vmul.f32 %v555, %v891
        %v1014 = vmul.f32 %v556, %v901
        %v1015 = vmul.f32 %v557, %v901
        %v1016 = vmul.f32 %v558, %v911
        %v1017 = vmul.f32 %v559, %v911
        %v1018 = vmul.f32 %v560, %v921
        %v1019 = vmul.f32 %v561, %v921
        %v1020 = vmul.f32 %v562, %v931
        %v1021 = vmul.f32 %v563, %v931
        %v1022 = vmul.f32 %v564, %v941
        %v1023 = vmul.f32 %v565, %v941
        %v1024 = vmul.f32 %v566, %v951
        %v1025 = vmul.f32 %v567, %v951
        %v1026 = vmul.f32 %v568, %v961
        %v1027 = vmul.f32 %v569, %v961
        %v1028 = vmul.f32 %v570, %v971
        %v1029 = vmul.f32 %v571, %v971
        %v1030 = vmul.f32 %v572, %v981
        %v1031 = vmul.f32 %v573, %v981
        %v1033 = vperm.slane %v982, 0
        %v1034 = vperm.slane %v982, 1
        %v1037 = vmul.f32 %v984, %v1033
        %v1038 = vmul.f32 %v985, %v1034
        %v1039 = vmul.f32 %v986, %v1033
        %v1040 = vmul.f32 %v987, %v1034
        %v1041 = vmul.f32 %v988, %v1033
        %v1042 = vmul.f32 %v989, %v1034
        %v1043 = vmul.f32 %v990, %v1033
        %v1044 = vmul.f32 %v991, %v1034
        %v1045 = vmul.f32 %v992, %v1033
        %v1046 = vmul.f32 %v993, %v1034
        %v1047 = vmul.f32 %v994, %v1033
        %v1048 = vmul.f32 %v995, %v1034
        %v1049 = vmul.f32 %v996, %v1033
        %v1050 = vmul.f32 %v997, %v1034
        %v1051 = vmul.f32 %v998, %v1033
        %v1052 = vmul.f32 %v999, %v1034
        %v1053 = vmul.f32 %v1000, %v1033
        %v1054 = vmul.f32 %v1001, %v1034
        %v1055 = vmul.f32 %v1002, %v1033
        %v1056 = vmul.f32 %v1003, %v1034
        %v1057 = vmul.f32 %v1004, %v1033
        %v1058 = vmul.f32 %v1005, %v1034
        %v1059 = vmul.f32 %v1006, %v1033
        %v1060 = vmul.f32 %v1007, %v1034
        %v1061 = vmul.f32 %v1008, %v1033
        %v1062 = vmul.f32 %v1009, %v1034
        %v1063 = vmul.f32 %v1010, %v1033
        %v1064 = vmul.f32 %v1011, %v1034
        %v1065 = vmul.f32 %v1012, %v1033
        %v1066 = vmul.f32 %v1013, %v1034
        %v1067 = vmul.f32 %v1014, %v1033
        %v1068 = vmul.f32 %v1015, %v1034
        %v1069 = vmul.f32 %v1016, %v1033
        %v1070 = vmul.f32 %v1017, %v1034
        %v1071 = vmul.f32 %v1018, %v1033
        %v1072 = vmul.f32 %v1019, %v1034
        %v1073 = vmul.f32 %v1020, %v1033
        %v1074 = vmul.f32 %v1021, %v1034
        %v1075 = vmul.f32 %v1022, %v1033
        %v1076 = vmul.f32 %v1023, %v1034
        %v1077 = vmul.f32 %v1024, %v1033
        %v1078 = vmul.f32 %v1025, %v1034
        %v1079 = vmul.f32 %v1026, %v1033
        %v1080 = vmul.f32 %v1027, %v1034
        %v1081 = vmul.f32 %v1028, %v1033
        %v1082 = vmul.f32 %v1029, %v1034
        %v1083 = vmul.f32 %v1030, %v1033
        %v1084 = vmul.f32 %v1031, %v1034
        %v1086 = vperm.slane %v983, 0
        %v1087 = vperm.slane %v983, 1
        %v1090 = vadd.f32 %v1037, %v1086
        %v1091 = vadd.f32 %v1038, %v1087
        %v1092 = vadd.f32 %v1039, %v1086
        %v1093 = vadd.f32 %v1040, %v1087
        %v1094 = vadd.f32 %v1041, %v1086
        %v1095 = vadd.f32 %v1042, %v1087
        %v1096 = vadd.f32 %v1043, %v1086
        %v1097 = vadd.f32 %v1044, %v1087
        %v1098 = vadd.f32 %v1045, %v1086
        %v1099 = vadd.f32 %v1046, %v1087
        %v1100 = vadd.f32 %v1047, %v1086
        %v1101 = vadd.f32 %v1048, %v1087
        %v1102 = vadd.f32 %v1049, %v1086
        %v1103 = vadd.f32 %v1050, %v1087
        %v1104 = vadd.f32 %v1051, %v1086
        %v1105 = vadd.f32 %v1052, %v1087
        %v1106 = vadd.f32 %v1053, %v1086
        %v1107 = vadd.f32 %v1054, %v1087
        %v1108 = vadd.f32 %v1055, %v1086
        %v1109 = vadd.f32 %v1056, %v1087
        %v1110 = vadd.f32 %v1057, %v1086
        %v1111 = vadd.f32 %v1058, %v1087
        %v1112 = vadd.f32 %v1059, %v1086
        %v1113 = vadd.f32 %v1060, %v1087
        %v1114 = vadd.f32 %v1061, %v1086
        %v1115 = vadd.f32 %v1062, %v1087
        %v1116 = vadd.f32 %v1063, %v1086
        %v1117 = vadd.f32 %v1064, %v1087
        %v1118 = vadd.f32 %v1065, %v1086
        %v1119 = vadd.f32 %v1066, %v1087
        %v1120 = vadd.f32 %v1067, %v1086
        %v1121 = vadd.f32 %v1068, %v1087
        %v1122 = vadd.f32 %v1069, %v1086
        %v1123 = vadd.f32 %v1070, %v1087
        %v1124 = vadd.f32 %v1071, %v1086
        %v1125 = vadd.f32 %v1072, %v1087
        %v1126 = vadd.f32 %v1073, %v1086
        %v1127 = vadd.f32 %v1074, %v1087
        %v1128 = vadd.f32 %v1075, %v1086
        %v1129 = vadd.f32 %v1076, %v1087
        %v1130 = vadd.f32 %v1077, %v1086
        %v1131 = vadd.f32 %v1078, %v1087
        %v1132 = vadd.f32 %v1079, %v1086
        %v1133 = vadd.f32 %v1080, %v1087
        %v1134 = vadd.f32 %v1081, %v1086
        %v1135 = vadd.f32 %v1082, %v1087
        %v1136 = vadd.f32 %v1083, %v1086
        %v1137 = vadd.f32 %v1084, %v1087
        %1138 = vst [vmem:[%s275] sm:$0xff] %v1090
        %1139 = vst [vmem:[%s275 + $0x8] sm:$0xff] %v1091
        %1140 = vst [vmem:[%s275 + $0x10] sm:$0xff] %v1092
        %1141 = vst [vmem:[%s275 + $0x18] sm:$0xff] %v1093
        %1142 = vst [vmem:[%s275 + $0x20] sm:$0xff] %v1094
        %1143 = vst [vmem:[%s275 + $0x28] sm:$0xff] %v1095
        %1144 = vst [vmem:[%s275 + $0x30] sm:$0xff] %v1096
        %1145 = vst [vmem:[%s275 + $0x38] sm:$0xff] %v1097
        %1146 = vst [vmem:[%s275 + $0x40] sm:$0xff] %v1098
        %1147 = vst [vmem:[%s275 + $0x48] sm:$0xff] %v1099
        %1148 = vst [vmem:[%s275 + $0x50] sm:$0xff] %v1100
        %1149 = vst [vmem:[%s275 + $0x58] sm:$0xff] %v1101
        %1150 = vst [vmem:[%s275 + $0x60] sm:$0xff] %v1102
        %1151 = vst [vmem:[%s275 + $0x68] sm:$0xff] %v1103
        %1152 = vst [vmem:[%s275 + $0x70] sm:$0xff] %v1104
        %1153 = vst [vmem:[%s275 + $0x78] sm:$0xff] %v1105
        %1154 = vst [vmem:[%s275 + $0x80] sm:$0xff] %v1106
        %1155 = vst [vmem:[%s275 + $0x88] sm:$0xff] %v1107
        %1156 = vst [vmem:[%s275 + $0x90] sm:$0xff] %v1108
        %1157 = vst [vmem:[%s275 + $0x98] sm:$0xff] %v1109
        %1158 = vst [vmem:[%s275 + $0xa0] sm:$0xff] %v1110
        %1159 = vst [vmem:[%s275 + $0xa8] sm:$0xff] %v1111
        %1160 = vst [vmem:[%s275 + $0xb0] sm:$0xff] %v1112
        %1161 = vst [vmem:[%s275 + $0xb8] sm:$0xff] %v1113
        %1162 = vst [vmem:[%s275 + $0xc0] sm:$0xff] %v1114
        %1163 = vst [vmem:[%s275 + $0xc8] sm:$0xff] %v1115
        %1164 = vst [vmem:[%s275 + $0xd0] sm:$0xff] %v1116
        %1165 = vst [vmem:[%s275 + $0xd8] sm:$0xff] %v1117
        %1166 = vst [vmem:[%s275 + $0xe0] sm:$0xff] %v1118
        %1167 = vst [vmem:[%s275 + $0xe8] sm:$0xff] %v1119
        %1168 = vst [vmem:[%s275 + $0xf0] sm:$0xff] %v1120
        %1169 = vst [vmem:[%s275 + $0xf8] sm:$0xff] %v1121
        %1170 = vst [vmem:[%s275 + $0x100] sm:$0xff] %v1122
        %1171 = vst [vmem:[%s275 + $0x108] sm:$0xff] %v1123
        %1172 = vst [vmem:[%s275 + $0x110] sm:$0xff] %v1124
        %1173 = vst [vmem:[%s275 + $0x118] sm:$0xff] %v1125
        %1174 = vst [vmem:[%s275 + $0x120] sm:$0xff] %v1126
        %1175 = vst [vmem:[%s275 + $0x128] sm:$0xff] %v1127
        %1176 = vst [vmem:[%s275 + $0x130] sm:$0xff] %v1128
        %1177 = vst [vmem:[%s275 + $0x138] sm:$0xff] %v1129
        %1178 = vst [vmem:[%s275 + $0x140] sm:$0xff] %v1130
        %1179 = vst [vmem:[%s275 + $0x148] sm:$0xff] %v1131
        %1180 = vst [vmem:[%s275 + $0x150] sm:$0xff] %v1132
        %1181 = vst [vmem:[%s275 + $0x158] sm:$0xff] %v1133
        %1182 = vst [vmem:[%s275 + $0x160] sm:$0xff] %v1134
        %1183 = vst [vmem:[%s275 + $0x168] sm:$0xff] %v1135
        %1184 = vst [vmem:[%s275 + $0x170] sm:$0xff] %v1136
        %1185 = vst [vmem:[%s275 + $0x178] sm:$0xff] %v1137
        %s1186 = sand.u32 %s126, 1
        %s1187 = scalar_lea.sflag [#allocation4], %s1186
        %s1188 = sand.u32 %s126, 1
        %s1189 = smul.addr %s1188, 384
        %s1190 = scalar_lea.vmem [#allocation8], %s1189
        // Predicated region
        $region49: #{tpu_custom_call.1} parent=35 // pred_check
          %p1191 = pneg %p136
        $region50: #{tpu_custom_call.1} parent=35 // pred_check_branch
          %1193 = sbr.rel (%p1191) target = $region52
        $region51: #{tpu_custom_call.1} parent=35 // pred_region
          %s1194 = smul.u32 24, %s24
          %1196 = vsyncadd %s1187, 0
          %s1197 = smul.addr %s1194, 2
          %s1198 = smul.addr %s1197, 8
          %s1199 = scalar_lea.hbm %s4, %s1198
          %s1200 = sshll.u32 %s1190, 4
          %s1201 = int_to_ptr.vmem [resolvable:$true] %s1200
          %s1202 = sshll.u32 %s1199, 4
          %s1203 = int_to_ptr.hbm [resolvable:$true] %s1202
          %1208 = dma.vmem_to_hbm [thread:$0]  %s1201, 6144, %s1203, %s1187, 256, 256, 16
        $region52: #{tpu_custom_call.1} parent=35 // pred_fallthru
          _
      $region36: #{tpu_custom_call.1} parent=5 // pred_fallthru
        _
      %p1209 = scmp.le.s32.totalorder 2, %s19
      // Predicated region
      $region53: #{tpu_custom_call.1} parent=5 // pred_check
        %p1210 = pneg %p1209
      $region54: #{tpu_custom_call.1} parent=5 // pred_check_branch
        %1212 = sbr.rel (%p1210) target = $region56
      $region55: #{tpu_custom_call.1} parent=5 // pred_region
        %s1213 = ssub.s32 %s19, 2
        // Predicated region
        $region57: #{tpu_custom_call.1} parent=55 // pred_check
          %p1214 = pneg %p142
        $region58: #{tpu_custom_call.1} parent=55 // pred_check_branch
          %1216 = sbr.rel (%p1214) target = $region60
        $region59: #{tpu_custom_call.1} parent=55 // pred_region
          %s1217 = sand.u32 %s127, 1
          %s1218 = scalar_lea.sflag [#allocation4], %s1217
          %s1219 = sand.u32 %s127, 1
          %s1220 = smul.addr %s1219, 384
          %s1221 = scalar_lea.vmem [#allocation8], %s1220
          %1223 = dma.done %s1218, 6144
        $region60: #{tpu_custom_call.1} parent=55 // pred_fallthru
          _
      $region56: #{tpu_custom_call.1} parent=5 // pred_fallthru
        _
    $region6: #{tpu_custom_call.1} parent=1 // loop_footer
      %s23 = sadd.s32 1, %s19
    $region7: #{tpu_custom_call.1} parent=1 // loop_footer_branch
      %18 = sbr.rel target = $region3
    $region8: #{tpu_custom_call.1} parent=1 // loop_exit
      _
    %1224 = vsyncpa [#allocation3], 1
    %s1225 = scalar_lea.sflag [#allocation3], 1
    %1226 = vsyncpa %s1225, 1
    %1227 = vsyncpa [#allocation6], 1
    %s1228 = scalar_lea.sflag [#allocation6], 1
    %1229 = vsyncpa %s1228, 1
    %1230 = vsyncpa [#allocation4], 1
    %s1231 = scalar_lea.sflag [#allocation4], 1
    %1232 = vsyncpa %s1231, 1

</llo_original>
